<compile_context>
chip_gen: v7x
topology: tpu7x:2x2x1
jax: 0.10.0
libtpu: 0.0.40
codegen_flags: <defaults>
</compile_context>

<pallas_src>
import math
from functools import partial

import numpy as np
import jax
import jax.numpy as jnp
from jax.experimental import pallas as pl
from jax.experimental.pallas import tpu as pltpu


def _round_up(x, m):
    return -(-x // m) * m


def _qlinear_kernel(x_even_ref, x_odd_ref, x_cherry_ref, qw_ref, sc_ref,
                    cw_ref, b_ref, o_ref, acc_ref, *,
                    groups_per_tile, group_half, qmin):
    k = pl.program_id(2)

    # k == 0: initialize the accumulator with the (small) cherry matmul + bias.
    @pl.when(k == 0)
    def _init():
        acc_ref[...] = (
            jnp.dot(x_cherry_ref[...], cw_ref[...],
                    preferred_element_type=jnp.float32)
            + b_ref[...].astype(jnp.float32))

    # Unpack the 4-bit codes of this (tkp, tn) packed-weight tile.
    # (int8 view of the packed bytes; arithmetic shift + mask is nibble-exact.)
    q = qw_ref[...].astype(jnp.int32)                       # packed bytes
    low = ((q & 0xF) + qmin).astype(jnp.bfloat16)           # normal feature 2r
    high = (((q >> 4) & 0xF) + qmin).astype(jnp.bfloat16)   # normal feature 2r+1

    tkp, tn = q.shape
    # Group-wise scaling via reshape + broadcast multiply (no jnp.repeat).
    sc = sc_ref[...].astype(jnp.bfloat16)[:, None, :]       # (gpt, 1, tn)
    w_even = (low.reshape(groups_per_tile, group_half, tn) * sc).reshape(tkp, tn)
    w_odd = (high.reshape(groups_per_tile, group_half, tn) * sc).reshape(tkp, tn)

    acc_ref[...] += (
        jnp.dot(x_even_ref[...], w_even, preferred_element_type=jnp.float32)
        + jnp.dot(x_odd_ref[...], w_odd, preferred_element_type=jnp.float32))

    @pl.when(k == pl.num_programs(2) - 1)
    def _store():
        o_ref[...] = acc_ref[...].astype(o_ref.dtype)


def prepare_qlinear(cherry_indices, cherry_weight, qweight, scales, bias, *,
                    in_features, out_features, group_size, w_bits=4,
                    tk_target=512):
    """One-time (parameter-load-time) index math, repacking and padding."""
    assert w_bits == 4, "only the 4-bit path is implemented"
    assert in_features % 8 == 0 and out_features % 8 == 0
    assert group_size % 2 == 0, "group_size must be even (nibble packing)"

    cherry_idx = np.sort(np.asarray(cherry_indices).astype(np.int64))
    num_cherries = cherry_idx.size
    if num_cherries:
        assert np.unique(cherry_idx).size == num_cherries
        assert cherry_idx.min() >= 0 and cherry_idx.max() < in_features
    num_normal = in_features - num_cherries
    assert num_normal % 2 == 0

    mask = np.ones(in_features, bool)
    mask[cherry_idx] = False
    normal_idx = np.nonzero(mask)[0]
    even_idx = normal_idx[0::2]          # low-nibble features
    odd_idx = normal_idx[1::2]           # high-nibble features

    # K tile (normal input features per grid step): multiple of 256 so the
    # bf16 x tiles are lane-dense (tkp = tk//2 >= 128), and a multiple of
    # 8*group_size so the compact scales block has a sublane-aligned height.
    unit = math.lcm(256, 8 * group_size)
    tk = max(unit, tk_target // unit * unit)
    k_pad = _round_up(max(num_normal, 1), tk)
    hp = k_pad // 2                      # padded packed rows
    ngroups_pad = k_pad // group_size
    groups_per_tile = tk // group_size

    qw = np.asarray(qweight).astype(np.uint8)
    assert qw.shape == (num_normal // 2, out_features)
    qw_pad = np.zeros((hp, out_features), np.uint8)
    qw_pad[: num_normal // 2] = qw

    sc = np.asarray(scales).astype(np.float32)
    assert sc.shape[0] == math.ceil(num_normal / group_size)
    sc_pad = np.zeros((ngroups_pad, out_features), np.float32)
    sc_pad[: sc.shape[0]] = sc

    nc_pad = max(8, num_cherries)
    cw_pad = np.zeros((nc_pad, out_features), np.float32)
    if num_cherries:
        cw_pad[:num_cherries] = np.asarray(cherry_weight).astype(np.float32)
    cherry_idx_pad = np.zeros(nc_pad, np.int64)
    cherry_idx_pad[:num_cherries] = cherry_idx   # padded rows of cw are zero

    b = (np.zeros(out_features, np.float32) if bias is None
         else np.asarray(bias).astype(np.float32))

    return dict(
        even_idx=jnp.asarray(even_idx, jnp.int32),
        odd_idx=jnp.asarray(odd_idx, jnp.int32),
        cherry_idx=jnp.asarray(cherry_idx_pad, jnp.int32),
        qweight=jnp.asarray(qw_pad.view(np.int8)),            # packed bytes
        scales=jnp.asarray(sc_pad, jnp.float32),
        cherry_weight=jnp.asarray(cw_pad, jnp.bfloat16),
        bias=jnp.asarray(b.reshape(1, out_features), jnp.float32),
        meta=dict(in_features=in_features, out_features=out_features,
                  group_size=group_size, tk=tk, hp=hp, h=num_normal // 2,
                  nc_pad=nc_pad, groups_per_tile=groups_per_tile,
                  group_half=group_size // 2),
    )


def quant_linear_forward(x, prep):
    meta = prep["meta"]
    in_features = meta["in_features"]
    out_features = meta["out_features"]
    hp, h, nc_pad = meta["hp"], meta["h"], meta["nc_pad"]
    tkp = meta["tk"] // 2
    gpt, gh = meta["groups_per_tile"], meta["group_half"]

    orig_shape = x.shape
    xf = x.reshape(-1, in_features)
    m = xf.shape[0]
    x_bf = xf.astype(jnp.bfloat16)

    tm = min(256, _round_up(m, 8))
    m_pad = _round_up(m, tm)
    n = out_features
    tn = 256 if n % 256 == 0 else (128 if n % 128 == 0 else n)

    # Glue: split input features into even/odd-nibble and cherry streams with
    # static, precomputed index vectors (one gather each; no strided slices).
    x_even = jnp.take(x_bf, prep["even_idx"], axis=1)
    x_odd = jnp.take(x_bf, prep["odd_idx"], axis=1)
    x_ch = jnp.take(x_bf, prep["cherry_idx"], axis=1)
    x_even = jnp.pad(x_even, ((0, m_pad - m), (0, hp - h)))
    x_odd = jnp.pad(x_odd, ((0, m_pad - m), (0, hp - h)))
    x_ch = jnp.pad(x_ch, ((0, m_pad - m), (0, 0)))

    grid = (m_pad // tm, n // tn, hp // tkp)
    kernel = partial(_qlinear_kernel, groups_per_tile=gpt, group_half=gh,
                     qmin=-8)

    out = pl.pallas_call(
        kernel,
        out_shape=jax.ShapeDtypeStruct((m_pad, n), x.dtype),
        grid_spec=pltpu.PrefetchScalarGridSpec(
            num_scalar_prefetch=0,
            grid=grid,
            in_specs=[
                pl.BlockSpec((tm, tkp), lambda i, j, k: (i, k)),      # x even
                pl.BlockSpec((tm, tkp), lambda i, j, k: (i, k)),      # x odd
                pl.BlockSpec((tm, nc_pad), lambda i, j, k: (i, 0)),   # x cherry
                pl.BlockSpec((tkp, tn), lambda i, j, k: (k, j)),      # qweight
                pl.BlockSpec((gpt, tn), lambda i, j, k: (k, j)),      # scales
                pl.BlockSpec((nc_pad, tn), lambda i, j, k: (0, j)),   # cherry W
                pl.BlockSpec((1, tn), lambda i, j, k: (0, j)),        # bias
            ],
            out_specs=pl.BlockSpec((tm, tn), lambda i, j, k: (i, j)),
            scratch_shapes=[pltpu.VMEM((tm, tn), jnp.float32)],
        ),
        compiler_params=pltpu.CompilerParams(
            dimension_semantics=("parallel", "parallel", "arbitrary")),
    )(x_even, x_odd, x_ch, prep["qweight"], prep["scales"],
      prep["cherry_weight"], prep["bias"])

    return out[:m].reshape(orig_shape[:-1] + (out_features,))


if __name__ == "__main__":
    # Module hyperparameters (w_bits=4 path of the CUDA kernel).
    in_features, out_features = 640, 512
    batch, seq = 2, 8
    w_bits, group_size, cherry_fraction = 4, 32, 0.1

    num_cherries = math.ceil(in_features * cherry_fraction) // 8 * 8   # 64
    num_normal = in_features - num_cherries                            # 576
    ngroups = math.ceil(num_normal / group_size)                       # 18

    key = jax.random.PRNGKey(0)
    k1, k2, k3, k4, k5, k6 = jax.random.split(key, 6)

    cherry_indices = jnp.sort(
        jax.random.choice(k1, in_features, (num_cherries,), replace=False)
    ).astype(jnp.int32)
    cherry_weight = (0.02 * jax.random.normal(
        k2, (num_cherries, out_features))).astype(jnp.float32)
    # unsigned 4-bit codes in [0, 16); pack two consecutive normal features/byte
    int_nibbles = jax.random.randint(
        k3, (num_normal, out_features), 0, 16, dtype=jnp.int32)
    qweight_bytes = (int_nibbles[0::2] | (int_nibbles[1::2] << 4)).astype(jnp.int32)
    scales = jax.random.uniform(
        k4, (ngroups, out_features), minval=0.01, maxval=0.05).astype(jnp.float32)
    bias = (0.1 * jax.random.normal(k5, (out_features,))).astype(jnp.float32)
    x = jax.random.normal(k6, (batch, seq, in_features), dtype=jnp.float32)

    prep = prepare_qlinear(
        cherry_indices, cherry_weight, qweight_bytes, scales, bias,
        in_features=in_features, out_features=out_features,
        group_size=group_size, w_bits=w_bits,
        tk_target=256)   # small tk so the test exercises a multi-step K loop

    out = quant_linear_forward(x, prep)
    out = jax.block_until_ready(out)

    # Reference mirroring QuantLinear.unpack() + F.linear + bias, rounded to
    # bf16 at the same points as the kernel's dequantize path.
    def bf16(a):
        return np.asarray(
            jnp.asarray(a, dtype=jnp.float32).astype(jnp.bfloat16)
            .astype(jnp.float32), dtype=np.float64)

    qmin = -8
    codes = np.asarray(int_nibbles, dtype=np.float64) + qmin        # (num_normal, out)
    s_rep = np.repeat(bf16(scales), group_size, axis=0)[:num_normal]
    w_norm = bf16(codes * s_rep)                                    # bf16 dequant weights
    msk = np.ones(in_features, dtype=bool)
    msk[np.asarray(cherry_indices)] = False
    normal_idx = np.nonzero(msk)[0]
    W = np.zeros((in_features, out_features), dtype=np.float64)     # == weight.T
    W[normal_idx] = w_norm
    W[np.asarray(cherry_indices)] = bf16(cherry_weight)
    x_bf = bf16(x).reshape(-1, in_features)
    ref = (x_bf @ W + np.asarray(bias, np.float64)
           ).reshape(batch, seq, out_features)

    assert out.shape == (batch, seq, out_features)
    assert out.dtype == x.dtype
    np.testing.assert_allclose(np.asarray(out, np.float64), ref,
                               rtol=2e-2, atol=2e-2)
    print("KERNEL_OK")
</pallas_src>

<mosaic_0001>
module attributes {stable_mosaic.version = 11 : i64} {
  func.func @_qlinear_kernel(%arg0: i32, %arg1: i32, %arg2: i32, %arg3: memref<16x128xbf16, #tpu.memory_space<vmem>>, %arg4: memref<16x128xbf16, #tpu.memory_space<vmem>>, %arg5: memref<16x64xbf16, #tpu.memory_space<vmem>>, %arg6: memref<128x256xi8, #tpu.memory_space<vmem>>, %arg7: memref<8x256xf32, #tpu.memory_space<vmem>>, %arg8: memref<64x256xbf16, #tpu.memory_space<vmem>>, %arg9: memref<1x256xf32, #tpu.memory_space<vmem>>, %arg10: memref<16x256xf32, #tpu.memory_space<vmem>>, %arg11: memref<16x256xf32, #tpu.memory_space<vmem>>) attributes {dimension_semantics = [#tpu.dimension_semantics<parallel>, #tpu.dimension_semantics<parallel>, #tpu.dimension_semantics<arbitrary>], iteration_bounds = array<i64: 1, 2, 3>, scalar_prefetch = 0 : i64, scratch_operands = 1 : i64, tpu.core_type = #tpu.core_type<tc>, window_params = [{transform_indices = @transform_0, window_bounds = array<i64: 16, 128>}, {transform_indices = @transform_1, window_bounds = array<i64: 16, 128>}, {transform_indices = @transform_2, window_bounds = array<i64: 16, 64>}, {transform_indices = @transform_3, window_bounds = array<i64: 128, 256>}, {transform_indices = @transform_4, window_bounds = array<i64: 8, 256>}, {transform_indices = @transform_5, window_bounds = array<i64: 64, 256>}, {transform_indices = @transform_6, window_bounds = array<i64: 1, 256>}, {transform_indices = @transform_7, window_bounds = array<i64: 16, 256>}]} {
    %c0_i32 = arith.constant 0 : i32
    %0 = arith.cmpi eq, %arg2, %c0_i32 : i32
    %1 = arith.extui %0 : i1 to i32
    %c0_i32_0 = arith.constant 0 : i32
    %2 = arith.cmpi ne, %1, %c0_i32_0 : i32
    scf.if %2 {
      %c0_16 = arith.constant 0 : index
      %c0_17 = arith.constant 0 : index
      %39 = vector.load %arg5[%c0_16, %c0_17] : memref<16x64xbf16, #tpu.memory_space<vmem>>, vector<16x64xbf16>
      %c0_18 = arith.constant 0 : index
      %c0_19 = arith.constant 0 : index
      %40 = vector.load %arg8[%c0_18, %c0_19] : memref<64x256xbf16, #tpu.memory_space<vmem>>, vector<64x256xbf16>
      %cst_20 = arith.constant dense<0.000000e+00> : vector<16x256xf32>
      %41 = tpu.matmul %39, %40, %cst_20 {dimension_numbers = #tpu.dot_dimension_numbers<[1], [0], [0], [1], [0, 0, 1, 1], [], []>} : vector<16x64xbf16>, vector<64x256xbf16>, vector<16x256xf32> -> vector<16x256xf32>
      %c0_21 = arith.constant 0 : index
      %c0_22 = arith.constant 0 : index
      %42 = vector.load %arg9[%c0_21, %c0_22] : memref<1x256xf32, #tpu.memory_space<vmem>>, vector<1x256xf32>
      %43 = vector.broadcast %42 : vector<1x256xf32> to vector<16x256xf32>
      %44 = arith.addf %41, %43 : vector<16x256xf32>
      %c0_23 = arith.constant 0 : index
      %c0_24 = arith.constant 0 : index
      %45 = vector.load %arg11[%c0_23, %c0_24] : memref<16x256xf32, #tpu.memory_space<vmem>>, vector<16x256xf32>
      tpu.vector_store %arg11[%c0_23, %c0_24], %44 {strides = array<i32>} : memref<16x256xf32, #tpu.memory_space<vmem>>, vector<16x256xf32>,
    } else {
    }
    %c0 = arith.constant 0 : index
    %c0_1 = arith.constant 0 : index
    %3 = vector.load %arg6[%c0, %c0_1] : memref<128x256xi8, #tpu.memory_space<vmem>>, vector<128x256xi8>
    %4 = arith.extsi %3 : vector<128x256xi8> to vector<128x256xi32>
    %c15_i32 = arith.constant 15 : i32
    %5 = vector.broadcast %c15_i32 : i32 to vector<128x256xi32>
    %6 = arith.andi %4, %5 : vector<128x256xi32>
    %c-8_i32 = arith.constant -8 : i32
    %7 = vector.broadcast %c-8_i32 : i32 to vector<128x256xi32>
    %8 = arith.addi %6, %7 : vector<128x256xi32>
    %9 = arith.sitofp %8 : vector<128x256xi32> to vector<128x256xbf16>
    %c4_i32 = arith.constant 4 : i32
    %10 = vector.broadcast %c4_i32 : i32 to vector<128x256xi32>
    %11 = arith.shrsi %4, %10 : vector<128x256xi32>
    %c15_i32_2 = arith.constant 15 : i32
    %12 = vector.broadcast %c15_i32_2 : i32 to vector<128x256xi32>
    %13 = arith.andi %11, %12 : vector<128x256xi32>
    %c-8_i32_3 = arith.constant -8 : i32
    %14 = vector.broadcast %c-8_i32_3 : i32 to vector<128x256xi32>
    %15 = arith.addi %13, %14 : vector<128x256xi32>
    %16 = arith.sitofp %15 : vector<128x256xi32> to vector<128x256xbf16>
    %c0_4 = arith.constant 0 : index
    %c0_5 = arith.constant 0 : index
    %17 = vector.load %arg7[%c0_4, %c0_5] : memref<8x256xf32, #tpu.memory_space<vmem>>, vector<8x256xf32>
    %18 = arith.truncf %17 : vector<8x256xf32> to vector<8x256xbf16>
    %19 = vector.shape_cast %18 : vector<8x256xbf16> to vector<8x1x256xbf16>
    %20 = vector.shape_cast %9 : vector<128x256xbf16> to vector<8x16x256xbf16>
    %21 = vector.broadcast %19 : vector<8x1x256xbf16> to vector<8x16x256xbf16>
    %22 = arith.mulf %20, %21 : vector<8x16x256xbf16>
    %23 = vector.shape_cast %22 : vector<8x16x256xbf16> to vector<128x256xbf16>
    %24 = vector.shape_cast %16 : vector<128x256xbf16> to vector<8x16x256xbf16>
    %25 = vector.broadcast %19 : vector<8x1x256xbf16> to vector<8x16x256xbf16>
    %26 = arith.mulf %24, %25 : vector<8x16x256xbf16>
    %27 = vector.shape_cast %26 : vector<8x16x256xbf16> to vector<128x256xbf16>
    %c0_6 = arith.constant 0 : index
    %c0_7 = arith.constant 0 : index
    %28 = vector.load %arg11[%c0_6, %c0_7] : memref<16x256xf32, #tpu.memory_space<vmem>>, vector<16x256xf32>
    %c0_8 = arith.constant 0 : index
    %c0_9 = arith.constant 0 : index
    %29 = vector.load %arg3[%c0_8, %c0_9] : memref<16x128xbf16, #tpu.memory_space<vmem>>, vector<16x128xbf16>
    %cst = arith.constant dense<0.000000e+00> : vector<16x256xf32>
    %30 = tpu.matmul %29, %23, %cst {dimension_numbers = #tpu.dot_dimension_numbers<[1], [0], [0], [1], [0, 0, 1, 1], [], []>} : vector<16x128xbf16>, vector<128x256xbf16>, vector<16x256xf32> -> vector<16x256xf32>
    %c0_10 = arith.constant 0 : index
    %c0_11 = arith.constant 0 : index
    %31 = vector.load %arg4[%c0_10, %c0_11] : memref<16x128xbf16, #tpu.memory_space<vmem>>, vector<16x128xbf16>
    %cst_12 = arith.constant dense<0.000000e+00> : vector<16x256xf32>
    %32 = tpu.matmul %31, %27, %cst_12 {dimension_numbers = #tpu.dot_dimension_numbers<[1], [0], [0], [1], [0, 0, 1, 1], [], []>} : vector<16x128xbf16>, vector<128x256xbf16>, vector<16x256xf32> -> vector<16x256xf32>
    %33 = arith.addf %30, %32 : vector<16x256xf32>
    %34 = arith.addf %28, %33 : vector<16x256xf32>
    %c0_13 = arith.constant 0 : index
    %c0_14 = arith.constant 0 : index
    %35 = vector.load %arg11[%c0_13, %c0_14] : memref<16x256xf32, #tpu.memory_space<vmem>>, vector<16x256xf32>
    tpu.vector_store %arg11[%c0_13, %c0_14], %34 {strides = array<i32>} : memref<16x256xf32, #tpu.memory_space<vmem>>, vector<16x256xf32>,
    %c2_i32 = arith.constant 2 : i32
    %36 = arith.cmpi eq, %arg2, %c2_i32 : i32
    %37 = arith.extui %36 : i1 to i32
    %c0_i32_15 = arith.constant 0 : i32
    %38 = arith.cmpi ne, %37, %c0_i32_15 : i32
    scf.if %38 {
      %c0_16 = arith.constant 0 : index
      %c0_17 = arith.constant 0 : index
      %39 = vector.load %arg11[%c0_16, %c0_17] : memref<16x256xf32, #tpu.memory_space<vmem>>, vector<16x256xf32>
      %c0_18 = arith.constant 0 : index
      %c0_19 = arith.constant 0 : index
      %40 = vector.load %arg10[%c0_18, %c0_19] : memref<16x256xf32, #tpu.memory_space<vmem>>, vector<16x256xf32>
      tpu.vector_store %arg10[%c0_18, %c0_19], %39 {strides = array<i32>} : memref<16x256xf32, #tpu.memory_space<vmem>>, vector<16x256xf32>,
    } else {
    }
    return
  }
  func.func @transform_0(%arg0: i32, %arg1: i32, %arg2: i32) -> (i32, i32) {
    %c0_i32 = arith.constant 0 : i32
    return %arg0, %arg2 : i32, i32
  }
  func.func @transform_1(%arg0: i32, %arg1: i32, %arg2: i32) -> (i32, i32) {
    %c0_i32 = arith.constant 0 : i32
    return %arg0, %arg2 : i32, i32
  }
  func.func @transform_2(%arg0: i32, %arg1: i32, %arg2: i32) -> (i32, i32) {
    %c0_i32 = arith.constant 0 : i32
    %c0_i32_0 = arith.constant 0 : i32
    return %arg0, %c0_i32 : i32, i32
  }
  func.func @transform_3(%arg0: i32, %arg1: i32, %arg2: i32) -> (i32, i32) {
    %c0_i32 = arith.constant 0 : i32
    return %arg2, %arg1 : i32, i32
  }
  func.func @transform_4(%arg0: i32, %arg1: i32, %arg2: i32) -> (i32, i32) {
    %c0_i32 = arith.constant 0 : i32
    return %arg2, %arg1 : i32, i32
  }
  func.func @transform_5(%arg0: i32, %arg1: i32, %arg2: i32) -> (i32, i32) {
    %c0_i32 = arith.constant 0 : i32
    %c0_i32_0 = arith.constant 0 : i32
    return %c0_i32, %arg1 : i32, i32
  }
  func.func @transform_6(%arg0: i32, %arg1: i32, %arg2: i32) -> (i32, i32) {
    %c0_i32 = arith.constant 0 : i32
    %c0_i32_0 = arith.constant 0 : i32
    return %c0_i32, %arg1 : i32, i32
  }
  func.func @transform_7(%arg0: i32, %arg1: i32, %arg2: i32) -> (i32, i32) {
    %c0_i32 = arith.constant 0 : i32
    return %arg0, %arg1 : i32, i32
  }
}

</mosaic_0001>

<llo_original>
// kernel: tpu_custom_call.1
$region0: #{tpu_custom_call.1}
  #allocation0 [shape = 'u32[]', space=smem, size = 0x4, offset = 0x4, fixed_abs, tag = 'smem constant byte address 0x4 - core index']
  #allocation1 [shape = 'u32[144,128]{1,0:T(1,128)}', space=vmem, size = 0x12000, scoped, tag = 'internal scratch']
  #allocation2 [shape = 'f32[16,256]{1,0:T(8,128)}', space=vmem, size = 0x4000, scoped, tag = 'scratch operand']
  %s0 = inlined_call_operand.hbm [shape: bf16[16,384], index: 0, kind: input, shape index: {}]
  %s1 = inlined_call_operand.hbm [shape: bf16[16,384], index: 1, kind: input, shape index: {}]
  %s2 = inlined_call_operand.hbm [shape: bf16[16,64], index: 2, kind: input, shape index: {}]
  %s3 = inlined_call_operand.hbm [shape: s8[384,512], index: 3, kind: input, shape index: {}]
  %s4 = inlined_call_operand.hbm [shape: f32[24,512], index: 4, kind: input, shape index: {}]
  %s5 = inlined_call_operand.hbm [shape: bf16[64,512], index: 5, kind: input, shape index: {}]
  %s6 = inlined_call_operand.vmem [shape: f32[1,512], index: 6, kind: input, shape index: {}]
  %s7 = inlined_call_operand.hbm [shape: f32[16,512], index: 7, kind: output, shape index: {}]
  %s8 = sld [smem:[#allocation0]]
  $region93: #{tpu_custom_call.1} parent=0
    _
  %s10 = ssub.s32 1, %s8
  %s11 = scalar_select 0, %s10, %s8
  $region1: #{tpu_custom_call.1} parent=0
    #allocation3 [shape = 'u8[8192]{0}', space=vmem, size = 0x2000, scoped, tag = 'input window, operand 0']
    #allocation4 [shape = 's32[2]{0}', space=sflag, size = 0x8, scoped, tag = 'scoped memory for tpu_custom_call.1']
    #allocation5 [shape = 's32[2]{0}', space=sflag, size = 0x8, scoped, tag = 'scoped memory for tpu_custom_call.1']
    #allocation6 [shape = 'u8[8192]{0}', space=vmem, size = 0x2000, scoped, tag = 'input window, operand 1']
    #allocation7 [shape = 's32[2]{0}', space=sflag, size = 0x8, scoped, tag = 'scoped memory for tpu_custom_call.1']
    #allocation8 [shape = 'u8[4096]{0}', space=vmem, size = 0x1000, scoped, tag = 'input window, operand 2, single buffered']
    #allocation9 [shape = 'u8[65536]{0}', space=vmem, size = 0x10000, scoped, tag = 'input window, operand 3']
    #allocation10 [shape = 's32[2]{0}', space=sflag, size = 0x8, scoped, tag = 'scoped memory for tpu_custom_call.1']
    #allocation11 [shape = 'u8[16384]{0}', space=vmem, size = 0x4000, scoped, tag = 'input window, operand 4']
    #allocation12 [shape = 'u8[65536]{0}', space=vmem, size = 0x10000, scoped, tag = 'input window, operand 5']
    #allocation13 [shape = 's32[2]{0}', space=sflag, size = 0x8, scoped, tag = 'scoped memory for tpu_custom_call.1']
    #allocation14 [shape = 'u8[32768]{0}', space=vmem, size = 0x8000, scoped, tag = 'output window, operand 0']
    %12 = vsyncpa [#allocation4], 0
    %s13 = scalar_lea.sflag [#allocation4], 1
    %14 = vsyncpa %s13, 0
    %15 = vsyncpa [#allocation7], 0
    %s16 = scalar_lea.sflag [#allocation7], 1
    %17 = vsyncpa %s16, 0
    %18 = vsyncpa [#allocation10], 0
    %s19 = scalar_lea.sflag [#allocation10], 1
    %20 = vsyncpa %s19, 0
    %21 = vsyncpa [#allocation13], 0
    %s22 = scalar_lea.sflag [#allocation13], 1
    %23 = vsyncpa %s22, 0
    %24 = vsyncpa [#allocation5], 0
    %s25 = scalar_lea.sflag [#allocation5], 1
    %26 = vsyncpa %s25, 0
    loop: start=0, step=1, limit=8
    $region2: #{tpu_custom_call.1} parent=1 // loop_pre_header
      _
    $region3: #{tpu_custom_call.1} parent=1 // loop_header
      %s28 = sphi 0, %s32
      %p29 = scmp.ge.s32.totalorder %s28, 8
      %s35 = sphi 0, %s54
      %s36 = sphi 0, %s50
      %s37 = sphi 0, %s46
      %s38 = sphi 0, %s35
      %s39 = sphi 0, %s36
      %s40 = sphi 0, %s37
      %s41 = sphi 0, %s38
      %s42 = sphi 0, %s39
      %s43 = sphi 0, %s40
      %s59 = sphi 0, %s61
      %s62 = sphi 0, %s59
      %s63 = sphi 0, %s62
      %s79 = sphi 0, %s63
      %s87 = sphi 0, %s89
      %s90 = sphi 0, %s87
      %s91 = sphi 0, %s90
      %s107 = sphi 0, %s91
      %s113 = sphi 0, %s115
      %s116 = sphi 0, %s113
      %s117 = sphi 0, %s116
      %s133 = sphi 0, %s117
      %s141 = sphi 0, %s143
      %s144 = sphi 0, %s141
      %s145 = sphi 0, %s144
      %s161 = sphi 0, %s145
      %s169 = sphi 0, %s171
      %s172 = sphi 0, %s169
      %s173 = sphi 0, %s172
      %s189 = sphi 0, %s173
      %s195 = sphi 0, %s197
      %s198 = sphi 0, %s195
      %s199 = sphi 0, %s198
      %s215 = sphi 0, %s199
      %s221 = sphi 0, %s223
      %s224 = sphi 0, %s221
      %s225 = sphi 0, %s224
      %s241 = sphi 0, %s225
      %s249 = sphi 0, %s251
      %s252 = sphi 0, %s249
      %s253 = sphi 0, %s252
      %s269 = sphi 0, %s253
    $region4: #{tpu_custom_call.1} parent=1 // loop_header_branch
      %31 = sbr.rel (%p29) target = $region8
    $region5: #{tpu_custom_call.1} parent=1 // loop_body
      %s33 = ssub.s32 %s28, 1
      %s34 = ssub.s32 %s28, 2
      %s44 = sadd.s32 1, %s37
      %p45 = scmp.ge.s32.totalorder %s44, 3
      %s46 = scalar_select %p45, 0, %s44
      %s47 = sadd.s32 1, %s36
      %s48 = scalar_select %p45, %s47, %s36
      %p49 = scmp.ge.s32.totalorder %s48, 2
      %s50 = scalar_select %p49, 0, %s48
      %s51 = sadd.s32 1, %s35
      %s52 = scalar_select %p49, %s51, %s35
      %p53 = scmp.ge.s32.totalorder %s52, 1
      %s54 = scalar_select %p53, 0, %s52
      %s55 = ssub.s32 %s35, %s54
      %s56 = ssub.s32 %s37, %s46
      %s57 = sor.u32 %s55, %s56
      %p58 = scmp.eq.s32.totalorder %s57, 0
      %s60 = sadd.s32 %s59, 1
      %s61 = scalar_select %p58, %s59, %s60
      %p64 = pneg %p58
      %p65 = scmp.eq.s32.totalorder %s28, 5
      %p66 = por %p64, %p65
      %p67 = scmp.ne.s32.totalorder %s59, %s62
      %p68 = scmp.eq.s32.totalorder %s28, 0
      %p69 = por %p67, %p68
      %p70 = scmp.ne.s32.totalorder %s59, %s62
      %p71 = scmp.eq.s32.totalorder %s33, 5
      %p72 = por %p70, %p71
      %p73 = scmp.ne.s32.totalorder %s62, %s63
      %p74 = scmp.eq.s32.totalorder %s33, 0
      %p75 = por %p73, %p74
      %p76 = scmp.ne.s32.totalorder %s62, %s63
      %p77 = scmp.eq.s32.totalorder %s34, 5
      %p78 = por %p76, %p77
      %p80 = scmp.ne.s32.totalorder %s63, %s79
      %p81 = scmp.eq.s32.totalorder %s34, 0
      %p82 = por %p80, %p81
      %s83 = ssub.s32 %s35, %s54
      %s84 = ssub.s32 %s37, %s46
      %s85 = sor.u32 %s83, %s84
      %p86 = scmp.eq.s32.totalorder %s85, 0
      %s88 = sadd.s32 %s87, 1
      %s89 = scalar_select %p86, %s87, %s88
      %p92 = pneg %p86
      %p93 = scmp.eq.s32.totalorder %s28, 5
      %p94 = por %p92, %p93
      %p95 = scmp.ne.s32.totalorder %s87, %s90
      %p96 = scmp.eq.s32.totalorder %s28, 0
      %p97 = por %p95, %p96
      %p98 = scmp.ne.s32.totalorder %s87, %s90
      %p99 = scmp.eq.s32.totalorder %s33, 5
      %p100 = por %p98, %p99
      %p101 = scmp.ne.s32.totalorder %s90, %s91
      %p102 = scmp.eq.s32.totalorder %s33, 0
      %p103 = por %p101, %p102
      %p104 = scmp.ne.s32.totalorder %s90, %s91
      %p105 = scmp.eq.s32.totalorder %s34, 5
      %p106 = por %p104, %p105
      %p108 = scmp.ne.s32.totalorder %s91, %s107
      %p109 = scmp.eq.s32.totalorder %s34, 0
      %p110 = por %p108, %p109
      %s111 = ssub.s32 %s35, %s54
      %p112 = scmp.eq.s32.totalorder %s111, 0
      %s114 = sadd.s32 %s113, 1
      %s115 = scalar_select %p112, %s113, %s114
      %p118 = pneg %p112
      %p119 = scmp.eq.s32.totalorder %s28, 5
      %p120 = por %p118, %p119
      %p121 = scmp.ne.s32.totalorder %s113, %s116
      %p122 = scmp.eq.s32.totalorder %s28, 0
      %p123 = por %p121, %p122
      %p124 = scmp.ne.s32.totalorder %s113, %s116
      %p125 = scmp.eq.s32.totalorder %s33, 5
      %p126 = por %p124, %p125
      %p127 = scmp.ne.s32.totalorder %s116, %s117
      %p128 = scmp.eq.s32.totalorder %s33, 0
      %p129 = por %p127, %p128
      %p130 = scmp.ne.s32.totalorder %s116, %s117
      %p131 = scmp.eq.s32.totalorder %s34, 5
      %p132 = por %p130, %p131
      %p134 = scmp.ne.s32.totalorder %s117, %s133
      %p135 = scmp.eq.s32.totalorder %s34, 0
      %p136 = por %p134, %p135
      %s137 = ssub.s32 %s37, %s46
      %s138 = ssub.s32 %s36, %s50
      %s139 = sor.u32 %s137, %s138
      %p140 = scmp.eq.s32.totalorder %s139, 0
      %s142 = sadd.s32 %s141, 1
      %s143 = scalar_select %p140, %s141, %s142
      %p146 = pneg %p140
      %p147 = scmp.eq.s32.totalorder %s28, 5
      %p148 = por %p146, %p147
      %p149 = scmp.ne.s32.totalorder %s141, %s144
      %p150 = scmp.eq.s32.totalorder %s28, 0
      %p151 = por %p149, %p150
      %p152 = scmp.ne.s32.totalorder %s141, %s144
      %p153 = scmp.eq.s32.totalorder %s33, 5
      %p154 = por %p152, %p153
      %p155 = scmp.ne.s32.totalorder %s144, %s145
      %p156 = scmp.eq.s32.totalorder %s33, 0
      %p157 = por %p155, %p156
      %p158 = scmp.ne.s32.totalorder %s144, %s145
      %p159 = scmp.eq.s32.totalorder %s34, 5
      %p160 = por %p158, %p159
      %p162 = scmp.ne.s32.totalorder %s145, %s161
      %p163 = scmp.eq.s32.totalorder %s34, 0
      %p164 = por %p162, %p163
      %s165 = ssub.s32 %s37, %s46
      %s166 = ssub.s32 %s36, %s50
      %s167 = sor.u32 %s165, %s166
      %p168 = scmp.eq.s32.totalorder %s167, 0
      %s170 = sadd.s32 %s169, 1
      %s171 = scalar_select %p168, %s169, %s170
      %p174 = pneg %p168
      %p175 = scmp.eq.s32.totalorder %s28, 5
      %p176 = por %p174, %p175
      %p177 = scmp.ne.s32.totalorder %s169, %s172
      %p178 = scmp.eq.s32.totalorder %s28, 0
      %p179 = por %p177, %p178
      %p180 = scmp.ne.s32.totalorder %s169, %s172
      %p181 = scmp.eq.s32.totalorder %s33, 5
      %p182 = por %p180, %p181
      %p183 = scmp.ne.s32.totalorder %s172, %s173
      %p184 = scmp.eq.s32.totalorder %s33, 0
      %p185 = por %p183, %p184
      %p186 = scmp.ne.s32.totalorder %s172, %s173
      %p187 = scmp.eq.s32.totalorder %s34, 5
      %p188 = por %p186, %p187
      %p190 = scmp.ne.s32.totalorder %s173, %s189
      %p191 = scmp.eq.s32.totalorder %s34, 0
      %p192 = por %p190, %p191
      %s193 = ssub.s32 %s36, %s50
      %p194 = scmp.eq.s32.totalorder %s193, 0
      %s196 = sadd.s32 %s195, 1
      %s197 = scalar_select %p194, %s195, %s196
      %p200 = pneg %p194
      %p201 = scmp.eq.s32.totalorder %s28, 5
      %p202 = por %p200, %p201
      %p203 = scmp.ne.s32.totalorder %s195, %s198
      %p204 = scmp.eq.s32.totalorder %s28, 0
      %p205 = por %p203, %p204
      %p206 = scmp.ne.s32.totalorder %s195, %s198
      %p207 = scmp.eq.s32.totalorder %s33, 5
      %p208 = por %p206, %p207
      %p209 = scmp.ne.s32.totalorder %s198, %s199
      %p210 = scmp.eq.s32.totalorder %s33, 0
      %p211 = por %p209, %p210
      %p212 = scmp.ne.s32.totalorder %s198, %s199
      %p213 = scmp.eq.s32.totalorder %s34, 5
      %p214 = por %p212, %p213
      %p216 = scmp.ne.s32.totalorder %s199, %s215
      %p217 = scmp.eq.s32.totalorder %s34, 0
      %p218 = por %p216, %p217
      %s219 = ssub.s32 %s36, %s50
      %p220 = scmp.eq.s32.totalorder %s219, 0
      %s222 = sadd.s32 %s221, 1
      %s223 = scalar_select %p220, %s221, %s222
      %p226 = pneg %p220
      %p227 = scmp.eq.s32.totalorder %s28, 5
      %p228 = por %p226, %p227
      %p229 = scmp.ne.s32.totalorder %s221, %s224
      %p230 = scmp.eq.s32.totalorder %s28, 0
      %p231 = por %p229, %p230
      %p232 = scmp.ne.s32.totalorder %s221, %s224
      %p233 = scmp.eq.s32.totalorder %s33, 5
      %p234 = por %p232, %p233
      %p235 = scmp.ne.s32.totalorder %s224, %s225
      %p236 = scmp.eq.s32.totalorder %s33, 0
      %p237 = por %p235, %p236
      %p238 = scmp.ne.s32.totalorder %s224, %s225
      %p239 = scmp.eq.s32.totalorder %s34, 5
      %p240 = por %p238, %p239
      %p242 = scmp.ne.s32.totalorder %s225, %s241
      %p243 = scmp.eq.s32.totalorder %s34, 0
      %p244 = por %p242, %p243
      %s245 = ssub.s32 %s35, %s54
      %s246 = ssub.s32 %s36, %s50
      %s247 = sor.u32 %s245, %s246
      %p248 = scmp.eq.s32.totalorder %s247, 0
      %s250 = sadd.s32 %s249, 1
      %s251 = scalar_select %p248, %s249, %s250
      %p254 = pneg %p248
      %p255 = scmp.eq.s32.totalorder %s28, 5
      %p256 = por %p254, %p255
      %p257 = scmp.ne.s32.totalorder %s249, %s252
      %p258 = scmp.eq.s32.totalorder %s28, 0
      %p259 = por %p257, %p258
      %p260 = scmp.ne.s32.totalorder %s249, %s252
      %p261 = scmp.eq.s32.totalorder %s33, 5
      %p262 = por %p260, %p261
      %p263 = scmp.ne.s32.totalorder %s252, %s253
      %p264 = scmp.eq.s32.totalorder %s33, 0
      %p265 = por %p263, %p264
      %p266 = scmp.ne.s32.totalorder %s252, %s253
      %p267 = scmp.eq.s32.totalorder %s34, 5
      %p268 = por %p266, %p267
      %p270 = scmp.ne.s32.totalorder %s253, %s269
      %p271 = scmp.eq.s32.totalorder %s34, 0
      %p272 = por %p270, %p271
      %p273 = scmp.le.s32.totalorder 1, %s28
      %p274 = scmp.lt.s32.totalorder %s28, 7
      %p275 = pnand %p273, %p274
      %p276 = pneg %p275
      // Predicated region
      $region9: #{tpu_custom_call.1} parent=5 // pred_check
        _
      $region10: #{tpu_custom_call.1} parent=5 // pred_check_branch
        %278 = sbr.rel (%p275) target = $region12
      $region11: #{tpu_custom_call.1} parent=5 // pred_region
        %s279 = ssub.s32 %s28, 1
        // Predicated region
        $region13: #{tpu_custom_call.1} parent=11 // pred_check
          %p280 = pneg %p129
        $region14: #{tpu_custom_call.1} parent=11 // pred_check_branch
          %282 = sbr.rel (%p280) target = $region16
        $region15: #{tpu_custom_call.1} parent=11 // pred_region
          %s283 = smul.u32 2, %s38
          %s285 = ssub.s32 128, 128
          %286 = vsyncadd [#allocation7], %s285
          %s287 = smul.addr %s283, 64
          %s288 = scalar_lea.hbm %s2, %s287
          %s289 = sshll.u32 [#allocation8], 4
          %s290 = int_to_ptr.vmem [resolvable:$true] %s289
          %295 = dma.hbm_to_vmem [thread:$0]  %s288, 128, %s290, [#allocation7], 64, 64, 4
        $region16: #{tpu_custom_call.1} parent=11 // pred_fallthru
          _
      $region12: #{tpu_custom_call.1} parent=5 // pred_fallthru
        _
      %p296 = scmp.lt.s32.totalorder %s28, 6
      // Predicated region
      $region17: #{tpu_custom_call.1} parent=5 // pred_check
        %p297 = pneg %p296
      $region18: #{tpu_custom_call.1} parent=5 // pred_check_branch
        %299 = sbr.rel (%p297) target = $region20
      $region19: #{tpu_custom_call.1} parent=5 // pred_region
        // Predicated region
        $region21: #{tpu_custom_call.1} parent=19 // pred_check
          %p300 = pneg %p69
        $region22: #{tpu_custom_call.1} parent=19 // pred_check_branch
          %302 = sbr.rel (%p300) target = $region24
        $region23: #{tpu_custom_call.1} parent=19 // pred_region
          %s303 = sand.u32 %s59, 1
          %s304 = scalar_lea.sflag [#allocation4], %s303
          %s305 = sand.u32 %s59, 1
          %s306 = smul.addr %s305, 8
          %s307 = scalar_lea.vmem [#allocation3], %s306
          %s308 = smul.u32 2, %s35
          %s310 = ssub.s32 128, 128
          %311 = vsyncadd %s304, %s310
          %s312 = smul.addr %s308, 3
          %s313 = sadd.s32 %s37, %s312
          %s314 = smul.addr %s313, 64
          %s315 = scalar_lea.hbm %s0, %s314
          %s316 = sshll.u32 %s307, 4
          %s317 = int_to_ptr.vmem [resolvable:$true] %s316
          %322 = dma.hbm_to_vmem [thread:$0]  %s315, 128, %s317, %s304, 192, 64, 4
        $region24: #{tpu_custom_call.1} parent=19 // pred_fallthru
          _
        // Predicated region
        $region25: #{tpu_custom_call.1} parent=19 // pred_check
          %p323 = pneg %p97
        $region26: #{tpu_custom_call.1} parent=19 // pred_check_branch
          %325 = sbr.rel (%p323) target = $region28
        $region27: #{tpu_custom_call.1} parent=19 // pred_region
          %s326 = sand.u32 %s28, 1
          %s327 = scalar_lea.sflag [#allocation7], %s326
          %s328 = sand.u32 %s87, 1
          %s329 = smul.addr %s328, 8
          %s330 = scalar_lea.vmem [#allocation6], %s329
          %s331 = smul.u32 2, %s35
          %s333 = ssub.s32 128, 128
          %334 = vsyncadd %s327, %s333
          %s335 = smul.addr %s331, 3
          %s336 = sadd.s32 %s37, %s335
          %s337 = smul.addr %s336, 64
          %s338 = scalar_lea.hbm %s1, %s337
          %s339 = sshll.u32 %s330, 4
          %s340 = int_to_ptr.vmem [resolvable:$true] %s339
          %345 = dma.hbm_to_vmem [thread:$0]  %s338, 128, %s340, %s327, 192, 64, 4
        $region28: #{tpu_custom_call.1} parent=19 // pred_fallthru
          _
        // Predicated region
        $region29: #{tpu_custom_call.1} parent=19 // pred_check
          %p346 = pneg %p151
        $region30: #{tpu_custom_call.1} parent=19 // pred_check_branch
          %348 = sbr.rel (%p346) target = $region32
        $region31: #{tpu_custom_call.1} parent=19 // pred_region
          %s349 = sand.u32 %s28, 1
          %s350 = scalar_lea.sflag [#allocation10], %s349
          %s351 = sand.u32 %s141, 1
          %s352 = smul.addr %s351, 64
          %s353 = scalar_lea.vmem [#allocation9], %s352
          %s354 = smul.u32 4, %s37
          %s355 = smul.u32 2, %s36
          %s357 = ssub.s32 1024, 1024
          %358 = vsyncadd %s350, %s357
          %s359 = smul.addr %s354, 4
          %s360 = sadd.s32 %s355, %s359
          %s361 = smul.addr %s360, 128
          %s362 = scalar_lea.hbm %s3, %s361
          %s363 = sshll.u32 %s353, 4
          %s364 = int_to_ptr.vmem [resolvable:$true] %s363
          %369 = dma.hbm_to_vmem [thread:$0]  %s362, 1024, %s364, %s350, 512, 256, 16
        $region32: #{tpu_custom_call.1} parent=19 // pred_fallthru
          _
        // Predicated region
        $region33: #{tpu_custom_call.1} parent=19 // pred_check
          %p370 = pneg %p179
        $region34: #{tpu_custom_call.1} parent=19 // pred_check_branch
          %372 = sbr.rel (%p370) target = $region36
        $region35: #{tpu_custom_call.1} parent=19 // pred_region
          %s373 = sand.u32 %s28, 1
          %s374 = scalar_lea.sflag [#allocation10], %s373
          %s375 = sand.u32 %s169, 1
          %s376 = smul.addr %s375, 16
          %s377 = scalar_lea.vmem [#allocation11], %s376
          %s378 = smul.u32 2, %s36
          %s380 = ssub.s32 256, 256
          %381 = vsyncadd %s374, %s380
          %s382 = smul.addr %s37, 4
          %s383 = sadd.s32 %s378, %s382
          %s384 = smul.addr %s383, 128
          %s385 = scalar_lea.hbm %s4, %s384
          %s387 = sshll.u32 %s377, 4
          %s388 = int_to_ptr.vmem [resolvable:$true] %s387
          %390 = dma.hbm_to_vmem [thread:$0]  %s385, 256, %s388, %s374
        $region36: #{tpu_custom_call.1} parent=19 // pred_fallthru
          _
        // Predicated region
        $region37: #{tpu_custom_call.1} parent=19 // pred_check
          %p391 = pneg %p205
        $region38: #{tpu_custom_call.1} parent=19 // pred_check_branch
          %393 = sbr.rel (%p391) target = $region40
        $region39: #{tpu_custom_call.1} parent=19 // pred_region
          %s394 = sand.u32 %s195, 1
          %s395 = scalar_lea.sflag [#allocation13], %s394
          %s396 = sand.u32 %s195, 1
          %s397 = smul.addr %s396, 64
          %s398 = scalar_lea.vmem [#allocation12], %s397
          %s399 = smul.u32 2, %s36
          %s401 = ssub.s32 1024, 1024
          %402 = vsyncadd %s395, %s401
          %s403 = smul.addr %s399, 64
          %s404 = scalar_lea.hbm %s5, %s403
          %s405 = sshll.u32 %s398, 4
          %s406 = int_to_ptr.vmem [resolvable:$true] %s405
          %411 = dma.hbm_to_vmem [thread:$0]  %s404, 1024, %s406, %s395, 256, 128, 8
        $region40: #{tpu_custom_call.1} parent=19 // pred_fallthru
          _
        // Predicated region
        $region41: #{tpu_custom_call.1} parent=19 // pred_check
          %p412 = pneg %p231
        $region42: #{tpu_custom_call.1} parent=19 // pred_check_branch
          %414 = sbr.rel (%p412) target = $region44
        $region43: #{tpu_custom_call.1} parent=19 // pred_region
          %s415 = smul.u32 2, %s36
          %p416 = scmp.lt.s32.totalorder %s415, 3
          %s417 = scalar_select %p416, %s415, 3
          %s418 = scalar_lea.vmem %s6, %s417
          %s419 = smul.u32 2, %s36
        $region44: #{tpu_custom_call.1} parent=19 // pred_fallthru
          _
      $region20: #{tpu_custom_call.1} parent=5 // pred_fallthru
        _
      %p420 = scmp.le.s32.totalorder 1, %s28
      %p421 = scmp.lt.s32.totalorder %s28, 7
      %p422 = pnand %p420, %p421
      %p423 = pneg %p422
      // Predicated region
      $region45: #{tpu_custom_call.1} parent=5 // pred_check
        _
      $region46: #{tpu_custom_call.1} parent=5 // pred_check_branch
        %425 = sbr.rel (%p422) target = $region48
      $region47: #{tpu_custom_call.1} parent=5 // pred_region
        %s426 = ssub.s32 %s28, 1
        %s427 = sand.u32 %s62, 1
        %s428 = scalar_lea.sflag [#allocation4], %s427
        %s429 = sand.u32 %s62, 1
        %s430 = smul.addr %s429, 8
        %s431 = scalar_lea.vmem [#allocation3], %s430
        // Predicated region
        $region49: #{tpu_custom_call.1} parent=47 // pred_check
          %p432 = pneg %p75
        $region50: #{tpu_custom_call.1} parent=47 // pred_check_branch
          %434 = sbr.rel (%p432) target = $region52
        $region51: #{tpu_custom_call.1} parent=47 // pred_region
          %435 = dma.done %s428, 128
        $region52: #{tpu_custom_call.1} parent=47 // pred_fallthru
          _
        %s436 = sand.u32 %s33, 1
        %s437 = scalar_lea.sflag [#allocation7], %s436
        %s438 = sand.u32 %s90, 1
        %s439 = smul.addr %s438, 8
        %s440 = scalar_lea.vmem [#allocation6], %s439
        // Predicated region
        $region53: #{tpu_custom_call.1} parent=47 // pred_check
          %p441 = pneg %p103
        $region54: #{tpu_custom_call.1} parent=47 // pred_check_branch
          %443 = sbr.rel (%p441) target = $region56
        $region55: #{tpu_custom_call.1} parent=47 // pred_region
          %444 = dma.done %s437, 128
        $region56: #{tpu_custom_call.1} parent=47 // pred_fallthru
          _
        // Predicated region
        $region57: #{tpu_custom_call.1} parent=47 // pred_check
          %p445 = pneg %p129
        $region58: #{tpu_custom_call.1} parent=47 // pred_check_branch
          %447 = sbr.rel (%p445) target = $region60
        $region59: #{tpu_custom_call.1} parent=47 // pred_region
          %448 = dma.done [#allocation7], 128
        $region60: #{tpu_custom_call.1} parent=47 // pred_fallthru
          _
        %s449 = sand.u32 %s33, 1
        %s450 = scalar_lea.sflag [#allocation10], %s449
        %s451 = sand.u32 %s144, 1
        %s452 = smul.addr %s451, 64
        %s453 = scalar_lea.vmem [#allocation9], %s452
        // Predicated region
        $region61: #{tpu_custom_call.1} parent=47 // pred_check
          %p454 = pneg %p157
        $region62: #{tpu_custom_call.1} parent=47 // pred_check_branch
          %456 = sbr.rel (%p454) target = $region64
        $region63: #{tpu_custom_call.1} parent=47 // pred_region
          %457 = dma.done %s450, 1024
        $region64: #{tpu_custom_call.1} parent=47 // pred_fallthru
          _
        %s458 = sand.u32 %s33, 1
        %s459 = scalar_lea.sflag [#allocation10], %s458
        %s460 = sand.u32 %s172, 1
        %s461 = smul.addr %s460, 16
        %s462 = scalar_lea.vmem [#allocation11], %s461
        // Predicated region
        $region65: #{tpu_custom_call.1} parent=47 // pred_check
          %p463 = pneg %p185
        $region66: #{tpu_custom_call.1} parent=47 // pred_check_branch
          %465 = sbr.rel (%p463) target = $region68
        $region67: #{tpu_custom_call.1} parent=47 // pred_region
          %466 = dma.done %s459, 256
        $region68: #{tpu_custom_call.1} parent=47 // pred_fallthru
          _
        %s467 = sand.u32 %s198, 1
        %s468 = scalar_lea.sflag [#allocation13], %s467
        %s469 = sand.u32 %s198, 1
        %s470 = smul.addr %s469, 64
        %s471 = scalar_lea.vmem [#allocation12], %s470
        // Predicated region
        $region69: #{tpu_custom_call.1} parent=47 // pred_check
          %p472 = pneg %p211
        $region70: #{tpu_custom_call.1} parent=47 // pred_check_branch
          %474 = sbr.rel (%p472) target = $region72
        $region71: #{tpu_custom_call.1} parent=47 // pred_region
          %475 = dma.done %s468, 1024
        $region72: #{tpu_custom_call.1} parent=47 // pred_fallthru
          _
        %s476 = sand.u32 %s62, 1
        %s477 = scalar_lea.sflag [#allocation4], %s476
        %s478 = sand.u32 %s62, 1
        %s479 = smul.addr %s478, 8
        %s480 = scalar_lea.vmem [#allocation3], %s479
        %p481 = pneg %p75
        %p482 = pneg %p72
        %s483 = sand.u32 %s33, 1
        %s484 = scalar_lea.sflag [#allocation7], %s483
        %s485 = sand.u32 %s90, 1
        %s486 = smul.addr %s485, 8
        %s487 = scalar_lea.vmem [#allocation6], %s486
        %p488 = pneg %p103
        %p489 = pneg %p100
        %p490 = pneg %p129
        %p491 = pneg %p126
        %s492 = sand.u32 %s33, 1
        %s493 = scalar_lea.sflag [#allocation10], %s492
        %s494 = sand.u32 %s144, 1
        %s495 = smul.addr %s494, 64
        %s496 = scalar_lea.vmem [#allocation9], %s495
        %p497 = pneg %p157
        %p498 = pneg %p154
        %s499 = sand.u32 %s33, 1
        %s500 = scalar_lea.sflag [#allocation10], %s499
        %s501 = sand.u32 %s172, 1
        %s502 = smul.addr %s501, 16
        %s503 = scalar_lea.vmem [#allocation11], %s502
        %p504 = pneg %p185
        %p505 = pneg %p182
        %s506 = sand.u32 %s198, 1
        %s507 = scalar_lea.sflag [#allocation13], %s506
        %s508 = sand.u32 %s198, 1
        %s509 = smul.addr %s508, 64
        %s510 = scalar_lea.vmem [#allocation12], %s509
        %p511 = pneg %p211
        %p512 = pneg %p208
        %s513 = smul.u32 2, %s39
        %p514 = scmp.lt.s32.totalorder %s513, 3
        %s515 = scalar_select %p514, %s513, 3
        %s516 = scalar_lea.vmem %s6, %s515
        %p517 = pneg %p237
        %p518 = pneg %p234
        %p519 = pneg %p265
        %p520 = pneg %p262
        %s521 = sand.u32 %s252, 1
        %s522 = scalar_lea.sflag [#allocation5], %s521
        %s523 = sand.u32 %s252, 1
        %s524 = smul.addr %s523, 32
        %s525 = scalar_lea.vmem [#allocation14], %s524
        %s526 = smul.u32 2, %s38
        %s527 = smul.u32 2, %s38
        %s528 = smul.u32 2, %s38
        %s529 = smul.u32 4, %s40
        %s530 = smul.u32 2, %s39
        %s531 = smul.u32 2, %s39
        %s532 = smul.u32 2, %s39
        %s533 = smul.u32 2, %s39
        %p534 = scmp.lt.s32.totalorder %s533, 3
        %s535 = scalar_select %p534, %s533, 3
        %s536 = scalar_lea.vmem %s6, %s535
        %s537 = smul.u32 2, %s39
        %s538 = smul.u32 2, %s38
        %s539 = smul.u32 2, %s39
        %p541 = scmp.eq.s32.totalorder %s40, 0
        // Predicated region
        $region73: #{tpu_custom_call.1} parent=47 // pred_check
          %p542 = pneg %p541
        $region74: #{tpu_custom_call.1} parent=47 // pred_check_branch
          %544 = sbr.rel (%p542) target = $region76
        $region75: #{tpu_custom_call.1} parent=47 // pred_region
          %v545 = vld [vmem:[#allocation8] sm:$0xf]
          %v546 = vld [vmem:[#allocation8 + $0x4] sm:$0xf]
          %v547 = vld [vmem:[%s471] sm:$0xff]
          %v548 = vld [vmem:[%s471 + $0x8] sm:$0xff]
          %v549 = vld [vmem:[%s471 + $0x10] sm:$0xff]
          %v550 = vld [vmem:[%s471 + $0x18] sm:$0xff]
          %v551 = vld [vmem:[%s471 + $0x20] sm:$0xff]
          %v552 = vld [vmem:[%s471 + $0x28] sm:$0xff]
          %v553 = vld [vmem:[%s471 + $0x30] sm:$0xff]
          %v554 = vld [vmem:[%s471 + $0x38] sm:$0xff]
          %v555 = vld [vmem:[%s536] sm:$0x3]
          %v557 = vlaneseq
          %v558 = vshrl.u32 %v557, 7
          %v559 = vsub.s32 0, %v558
          %v560 = vrot.slane %v555, %v559
          %v561 = vlaneseq
          %v562 = vshrl.u32 %v561, 7
          %v563 = vsub.s32 1, %v562
          %v564 = vrot.slane %v555, %v563
          %v569 = vunpack.c.l.b16 %v545
          %v570 = vunpack.c.l.b16 %v546
          %v571 = vpack.c.b16 %v570, %v569
          %v580 = vunpack.c.l.b16 %v547
          %v581 = vunpack.c.h.b16 %v547
          %v582 = vunpack.c.l.b16 %v548
          %v583 = vunpack.c.h.b16 %v548
          %v584 = vunpack.c.l.b16 %v549
          %v585 = vunpack.c.h.b16 %v549
          %v586 = vunpack.c.l.b16 %v550
          %v587 = vunpack.c.h.b16 %v550
          %v588 = vunpack.c.l.b16 %v551
          %v589 = vunpack.c.h.b16 %v551
          %v590 = vunpack.c.l.b16 %v552
          %v591 = vunpack.c.h.b16 %v552
          %v592 = vunpack.c.l.b16 %v553
          %v593 = vunpack.c.h.b16 %v553
          %v594 = vunpack.c.l.b16 %v554
          %v595 = vunpack.c.h.b16 %v554
          %v596 = vpack.c.b16 %v582, %v580
          %v597 = vpack.c.b16 %v583, %v581
          %v598 = vpack.c.b16 %v586, %v584
          %v599 = vpack.c.b16 %v587, %v585
          %v600 = vpack.c.b16 %v590, %v588
          %v601 = vpack.c.b16 %v591, %v589
          %v602 = vpack.c.b16 %v594, %v592
          %v603 = vpack.c.b16 %v595, %v593
          %vm612 = vcmask 523264
          %v614 = vsel %vm612, %v571, 0
          %616 = vmatprep.subr.bf16.mxu0 %v597
          %617 = vmatpush1.bf16.msra.mxu0 %v596
          %618 = vmatprep.subr.bf16.mxu0 %v599
          %619 = vmatpush1.bf16.msra.mxu0 %v598
          %620 = vmatprep.subr.bf16.mxu0 %v601
          %621 = vmatpush1.bf16.msra.mxu0 %v600
          %622 = vmatprep.subr.bf16.mxu0 %v603
          %623 = vmatpush1.bf16.msra.mxu0 %v602
          %624 = vmatprep.subr.bf16.mxu0 0
          %625 = vmatpush1.bf16.msra.mxu0 0
          %626 = vmatprep.subr.bf16.mxu0 0
          %627 = vmatpush1.bf16.msra.mxu0 0
          %628 = vmatprep.subr.bf16.mxu0 0
          %629 = vmatpush1.bf16.msra.mxu0 0
          %630 = vmatprep.subr.bf16.mxu0 0
          %631 = vmatpush1.bf16.msra.mxu0 0
          %632 = vmatprep.subr.bf16.mxu0 0
          %633 = vmatpush1.bf16.msra.mxu0 0
          %634 = vmatprep.subr.bf16.mxu0 0
          %635 = vmatpush1.bf16.msra.mxu0 0
          %636 = vmatprep.subr.bf16.mxu0 0
          %637 = vmatpush1.bf16.msra.mxu0 0
          %638 = vmatprep.subr.bf16.mxu0 0
          %639 = vmatpush1.bf16.msra.mxu0 0
          %640 = vmatprep.subr.bf16.mxu0 0
          %641 = vmatpush1.bf16.msra.mxu0 0
          %642 = vmatprep.subr.bf16.mxu0 0
          %643 = vmatpush1.bf16.msra.mxu0 0
          %644 = vmatprep.subr.bf16.mxu0 0
          %645 = vmatpush1.bf16.msra.mxu0 0
          %646 = vmatprep.subr.bf16.mxu0 0
          %647 = vmatpush1.bf16.msra.mxu0 0
          %648 = vmatprep.mubr.bf16.mxu0 0
          %649 = vmatmul.mubr.bf16.gmra.mrb[0].mxu0 %v614
          %v650 = vpop.f32.mrb[0].mxu0
          %v651 = vadd.f32 %v560, %v650
          %v652 = vpop.f32.mrb[0].mxu0
          %v653 = vadd.f32 %v564, %v652
          %v654 = vpop.f32.mrb[0].mxu0
          %v655 = vadd.f32 %v560, %v654
          %v656 = vpop.f32.mrb[0].mxu0
          %v657 = vadd.f32 %v564, %v656
          %658 = vdwg.mxu0
          %659 = vst [vmem:[#allocation2] sm:$0xff] %v651
          %660 = vst [vmem:[#allocation2 + $0x8] sm:$0xff] %v653
          %661 = vst [vmem:[#allocation2 + $0x10] sm:$0xff] %v655
          %662 = vst [vmem:[#allocation2 + $0x18] sm:$0xff] %v657
        $region76: #{tpu_custom_call.1} parent=47 // pred_fallthru
          _
        %v663 = vld [vmem:[%s453] sm:$0xff]
        %v664 = vld [vmem:[%s453 + $0x8] sm:$0xff]
        %v665 = vld [vmem:[%s453 + $0x10] sm:$0xff]
        %v666 = vld [vmem:[%s453 + $0x18] sm:$0xff]
        %v667 = vld [vmem:[%s453 + $0x20] sm:$0xff]
        %v668 = vld [vmem:[%s453 + $0x28] sm:$0xff]
        %v669 = vld [vmem:[%s453 + $0x30] sm:$0xff]
        %v670 = vld [vmem:[%s453 + $0x38] sm:$0xff]
        %v671 = vunpack.c.0.s8 %v663
        %v672 = vunpack.c.0.s8 %v664
        %v673 = vunpack.c.1.s8 %v663
        %v674 = vunpack.c.1.s8 %v664
        %v675 = vunpack.c.2.s8 %v663
        %v676 = vunpack.c.2.s8 %v664
        %v677 = vunpack.c.3.s8 %v663
        %v678 = vunpack.c.3.s8 %v664
        %v679 = vunpack.c.0.s8 %v665
        %v680 = vunpack.c.0.s8 %v666
        %v681 = vunpack.c.1.s8 %v665
        %v682 = vunpack.c.1.s8 %v666
        %v683 = vunpack.c.2.s8 %v665
        %v684 = vunpack.c.2.s8 %v666
        %v685 = vunpack.c.3.s8 %v665
        %v686 = vunpack.c.3.s8 %v666
        %v687 = vunpack.c.0.s8 %v667
        %v688 = vunpack.c.0.s8 %v668
        %v689 = vunpack.c.1.s8 %v667
        %v690 = vunpack.c.1.s8 %v668
        %v691 = vunpack.c.2.s8 %v667
        %v692 = vunpack.c.2.s8 %v668
        %v693 = vunpack.c.3.s8 %v667
        %v694 = vunpack.c.3.s8 %v668
        %v695 = vunpack.c.0.s8 %v669
        %v696 = vunpack.c.0.s8 %v670
        %v697 = vunpack.c.1.s8 %v669
        %v698 = vunpack.c.1.s8 %v670
        %v699 = vunpack.c.2.s8 %v669
        %v700 = vunpack.c.2.s8 %v670
        %v701 = vunpack.c.3.s8 %v669
        %v702 = vunpack.c.3.s8 %v670
        %v703 = vand.u32 %v671, 15
        %v704 = vand.u32 %v672, 15
        %v705 = vand.u32 %v673, 15
        %v706 = vand.u32 %v674, 15
        %v707 = vand.u32 %v675, 15
        %v708 = vand.u32 %v676, 15
        %v709 = vand.u32 %v677, 15
        %v710 = vand.u32 %v678, 15
        %v711 = vand.u32 %v679, 15
        %v712 = vand.u32 %v680, 15
        %v713 = vand.u32 %v681, 15
        %v714 = vand.u32 %v682, 15
        %v715 = vand.u32 %v683, 15
        %v716 = vand.u32 %v684, 15
        %v717 = vand.u32 %v685, 15
        %v718 = vand.u32 %v686, 15
        %v719 = vand.u32 %v687, 15
        %v720 = vand.u32 %v688, 15
        %v721 = vand.u32 %v689, 15
        %v722 = vand.u32 %v690, 15
        %v723 = vand.u32 %v691, 15
        %v724 = vand.u32 %v692, 15
        %v725 = vand.u32 %v693, 15
        %v726 = vand.u32 %v694, 15
        %v727 = vand.u32 %v695, 15
        %v728 = vand.u32 %v696, 15
        %v729 = vand.u32 %v697, 15
        %v730 = vand.u32 %v698, 15
        %v731 = vand.u32 %v699, 15
        %v732 = vand.u32 %v700, 15
        %v733 = vand.u32 %v701, 15
        %v734 = vand.u32 %v702, 15
        %v735 = vadd.s32 %v703, 4294967288
        %v736 = vadd.s32 %v704, 4294967288
        %v737 = vadd.s32 %v705, 4294967288
        %v738 = vadd.s32 %v706, 4294967288
        %v739 = vadd.s32 %v707, 4294967288
        %v740 = vadd.s32 %v708, 4294967288
        %v741 = vadd.s32 %v709, 4294967288
        %v742 = vadd.s32 %v710, 4294967288
        %v743 = vadd.s32 %v711, 4294967288
        %v744 = vadd.s32 %v712, 4294967288
        %v745 = vadd.s32 %v713, 4294967288
        %v746 = vadd.s32 %v714, 4294967288
        %v747 = vadd.s32 %v715, 4294967288
        %v748 = vadd.s32 %v716, 4294967288
        %v749 = vadd.s32 %v717, 4294967288
        %v750 = vadd.s32 %v718, 4294967288
        %v751 = vadd.s32 %v719, 4294967288
        %v752 = vadd.s32 %v720, 4294967288
        %v753 = vadd.s32 %v721, 4294967288
        %v754 = vadd.s32 %v722, 4294967288
        %v755 = vadd.s32 %v723, 4294967288
        %v756 = vadd.s32 %v724, 4294967288
        %v757 = vadd.s32 %v725, 4294967288
        %v758 = vadd.s32 %v726, 4294967288
        %v759 = vadd.s32 %v727, 4294967288
        %v760 = vadd.s32 %v728, 4294967288
        %v761 = vadd.s32 %v729, 4294967288
        %v762 = vadd.s32 %v730, 4294967288
        %v763 = vadd.s32 %v731, 4294967288
        %v764 = vadd.s32 %v732, 4294967288
        %v765 = vadd.s32 %v733, 4294967288
        %v766 = vadd.s32 %v734, 4294967288
        %v767 = vcvt.s32.f32 %v735
        %v768 = vcvt.s32.f32 %v736
        %v769 = vcvt.s32.f32 %v737
        %v770 = vcvt.s32.f32 %v738
        %v771 = vcvt.s32.f32 %v739
        %v772 = vcvt.s32.f32 %v740
        %v773 = vcvt.s32.f32 %v741
        %v774 = vcvt.s32.f32 %v742
        %v775 = vcvt.s32.f32 %v743
        %v776 = vcvt.s32.f32 %v744
        %v777 = vcvt.s32.f32 %v745
        %v778 = vcvt.s32.f32 %v746
        %v779 = vcvt.s32.f32 %v747
        %v780 = vcvt.s32.f32 %v748
        %v781 = vcvt.s32.f32 %v749
        %v782 = vcvt.s32.f32 %v750
        %v783 = vcvt.s32.f32 %v751
        %v784 = vcvt.s32.f32 %v752
        %v785 = vcvt.s32.f32 %v753
        %v786 = vcvt.s32.f32 %v754
        %v787 = vcvt.s32.f32 %v755
        %v788 = vcvt.s32.f32 %v756
        %v789 = vcvt.s32.f32 %v757
        %v790 = vcvt.s32.f32 %v758
        %v791 = vcvt.s32.f32 %v759
        %v792 = vcvt.s32.f32 %v760
        %v793 = vcvt.s32.f32 %v761
        %v794 = vcvt.s32.f32 %v762
        %v795 = vcvt.s32.f32 %v763
        %v796 = vcvt.s32.f32 %v764
        %v797 = vcvt.s32.f32 %v765
        %v798 = vcvt.s32.f32 %v766
        %v799 = vpack.c.bf16 %v769, %v767
        %v800 = vpack.c.bf16 %v770, %v768
        %v801 = vpack.c.bf16 %v773, %v771
        %v802 = vpack.c.bf16 %v774, %v772
        %v803 = vpack.c.bf16 %v777, %v775
        %v804 = vpack.c.bf16 %v778, %v776
        %v805 = vpack.c.bf16 %v781, %v779
        %v806 = vpack.c.bf16 %v782, %v780
        %v807 = vpack.c.bf16 %v785, %v783
        %v808 = vpack.c.bf16 %v786, %v784
        %v809 = vpack.c.bf16 %v789, %v787
        %v810 = vpack.c.bf16 %v790, %v788
        %v811 = vpack.c.bf16 %v793, %v791
        %v812 = vpack.c.bf16 %v794, %v792
        %v813 = vpack.c.bf16 %v797, %v795
        %v814 = vpack.c.bf16 %v798, %v796
        %v815 = vshra.s32 %v671, 4
        %v816 = vshra.s32 %v672, 4
        %v817 = vshra.s32 %v673, 4
        %v818 = vshra.s32 %v674, 4
        %v819 = vshra.s32 %v675, 4
        %v820 = vshra.s32 %v676, 4
        %v821 = vshra.s32 %v677, 4
        %v822 = vshra.s32 %v678, 4
        %v823 = vshra.s32 %v679, 4
        %v824 = vshra.s32 %v680, 4
        %v825 = vshra.s32 %v681, 4
        %v826 = vshra.s32 %v682, 4
        %v827 = vshra.s32 %v683, 4
        %v828 = vshra.s32 %v684, 4
        %v829 = vshra.s32 %v685, 4
        %v830 = vshra.s32 %v686, 4
        %v831 = vshra.s32 %v687, 4
        %v832 = vshra.s32 %v688, 4
        %v833 = vshra.s32 %v689, 4
        %v834 = vshra.s32 %v690, 4
        %v835 = vshra.s32 %v691, 4
        %v836 = vshra.s32 %v692, 4
        %v837 = vshra.s32 %v693, 4
        %v838 = vshra.s32 %v694, 4
        %v839 = vshra.s32 %v695, 4
        %v840 = vshra.s32 %v696, 4
        %v841 = vshra.s32 %v697, 4
        %v842 = vshra.s32 %v698, 4
        %v843 = vshra.s32 %v699, 4
        %v844 = vshra.s32 %v700, 4
        %v845 = vshra.s32 %v701, 4
        %v846 = vshra.s32 %v702, 4
        %v847 = vand.u32 %v815, 15
        %v848 = vand.u32 %v816, 15
        %v849 = vand.u32 %v817, 15
        %v850 = vand.u32 %v818, 15
        %v851 = vand.u32 %v819, 15
        %v852 = vand.u32 %v820, 15
        %v853 = vand.u32 %v821, 15
        %v854 = vand.u32 %v822, 15
        %v855 = vand.u32 %v823, 15
        %v856 = vand.u32 %v824, 15
        %v857 = vand.u32 %v825, 15
        %v858 = vand.u32 %v826, 15
        %v859 = vand.u32 %v827, 15
        %v860 = vand.u32 %v828, 15
        %v861 = vand.u32 %v829, 15
        %v862 = vand.u32 %v830, 15
        %v863 = vand.u32 %v831, 15
        %v864 = vand.u32 %v832, 15
        %v865 = vand.u32 %v833, 15
        %v866 = vand.u32 %v834, 15
        %v867 = vand.u32 %v835, 15
        %v868 = vand.u32 %v836, 15
        %v869 = vand.u32 %v837, 15
        %v870 = vand.u32 %v838, 15
        %v871 = vand.u32 %v839, 15
        %v872 = vand.u32 %v840, 15
        %v873 = vand.u32 %v841, 15
        %v874 = vand.u32 %v842, 15
        %v875 = vand.u32 %v843, 15
        %v876 = vand.u32 %v844, 15
        %v877 = vand.u32 %v845, 15
        %v878 = vand.u32 %v846, 15
        %v879 = vadd.s32 %v847, 4294967288
        %v880 = vadd.s32 %v848, 4294967288
        %v881 = vadd.s32 %v849, 4294967288
        %v882 = vadd.s32 %v850, 4294967288
        %v883 = vadd.s32 %v851, 4294967288
        %v884 = vadd.s32 %v852, 4294967288
        %v885 = vadd.s32 %v853, 4294967288
        %v886 = vadd.s32 %v854, 4294967288
        %v887 = vadd.s32 %v855, 4294967288
        %v888 = vadd.s32 %v856, 4294967288
        %v889 = vadd.s32 %v857, 4294967288
        %v890 = vadd.s32 %v858, 4294967288
        %v891 = vadd.s32 %v859, 4294967288
        %v892 = vadd.s32 %v860, 4294967288
        %v893 = vadd.s32 %v861, 4294967288
        %v894 = vadd.s32 %v862, 4294967288
        %v895 = vadd.s32 %v863, 4294967288
        %v896 = vadd.s32 %v864, 4294967288
        %v897 = vadd.s32 %v865, 4294967288
        %v898 = vadd.s32 %v866, 4294967288
        %v899 = vadd.s32 %v867, 4294967288
        %v900 = vadd.s32 %v868, 4294967288
        %v901 = vadd.s32 %v869, 4294967288
        %v902 = vadd.s32 %v870, 4294967288
        %v903 = vadd.s32 %v871, 4294967288
        %v904 = vadd.s32 %v872, 4294967288
        %v905 = vadd.s32 %v873, 4294967288
        %v906 = vadd.s32 %v874, 4294967288
        %v907 = vadd.s32 %v875, 4294967288
        %v908 = vadd.s32 %v876, 4294967288
        %v909 = vadd.s32 %v877, 4294967288
        %v910 = vadd.s32 %v878, 4294967288
        %v911 = vcvt.s32.f32 %v879
        %v912 = vcvt.s32.f32 %v880
        %v913 = vcvt.s32.f32 %v881
        %v914 = vcvt.s32.f32 %v882
        %v915 = vcvt.s32.f32 %v883
        %v916 = vcvt.s32.f32 %v884
        %v917 = vcvt.s32.f32 %v885
        %v918 = vcvt.s32.f32 %v886
        %v919 = vcvt.s32.f32 %v887
        %v920 = vcvt.s32.f32 %v888
        %v921 = vcvt.s32.f32 %v889
        %v922 = vcvt.s32.f32 %v890
        %v923 = vcvt.s32.f32 %v891
        %v924 = vcvt.s32.f32 %v892
        %v925 = vcvt.s32.f32 %v893
        %v926 = vcvt.s32.f32 %v894
        %v927 = vcvt.s32.f32 %v895
        %v928 = vcvt.s32.f32 %v896
        %v929 = vcvt.s32.f32 %v897
        %v930 = vcvt.s32.f32 %v898
        %v931 = vcvt.s32.f32 %v899
        %v932 = vcvt.s32.f32 %v900
        %v933 = vcvt.s32.f32 %v901
        %v934 = vcvt.s32.f32 %v902
        %v935 = vcvt.s32.f32 %v903
        %v936 = vcvt.s32.f32 %v904
        %v937 = vcvt.s32.f32 %v905
        %v938 = vcvt.s32.f32 %v906
        %v939 = vcvt.s32.f32 %v907
        %v940 = vcvt.s32.f32 %v908
        %v941 = vcvt.s32.f32 %v909
        %v942 = vcvt.s32.f32 %v910
        %v943 = vpack.c.bf16 %v913, %v911
        %v944 = vpack.c.bf16 %v914, %v912
        %v945 = vpack.c.bf16 %v917, %v915
        %v946 = vpack.c.bf16 %v918, %v916
        %v947 = vpack.c.bf16 %v921, %v919
        %v948 = vpack.c.bf16 %v922, %v920
        %v949 = vpack.c.bf16 %v925, %v923
        %v950 = vpack.c.bf16 %v926, %v924
        %v951 = vpack.c.bf16 %v929, %v927
        %v952 = vpack.c.bf16 %v930, %v928
        %v953 = vpack.c.bf16 %v933, %v931
        %v954 = vpack.c.bf16 %v934, %v932
        %v955 = vpack.c.bf16 %v937, %v935
        %v956 = vpack.c.bf16 %v938, %v936
        %v957 = vpack.c.bf16 %v941, %v939
        %v958 = vpack.c.bf16 %v942, %v940
        %v959 = vld [vmem:[%s462] sm:$0xff]
        %v960 = vld [vmem:[%s462 + $0x8] sm:$0xff]
        %v961 = vpack.c.bf16 %v959, %v959
        %v962 = vpack.c.bf16 %v960, %v960
        %v965 = vcombine.low %v961, %v962
        %v967 = vunpack.c.l.s4 1966171168
        %v968 = vunpack.c.0.s8 %v967
        %v969 = vlaneseq
        %v970 = vshrl.u32 %v969, 7
        %v971 = vsub.s32 %v968, %v970
        %v972 = vrot.slane %v965, %v971
        %v973 = vcombine.high %v972, %v972
        %v975 = vunpack.c.l.s4 1966171168
        %v976 = vunpack.c.0.s8 %v975
        %v977 = vlaneseq
        %v978 = vshrl.u32 %v977, 7
        %v979 = vsub.s32 %v976, %v978
        %v980 = vrot.slane %v972, %v979
        %v982 = vunpack.c.l.s4 1966171168
        %v983 = vunpack.c.0.s8 %v982
        %v984 = vlaneseq
        %v985 = vshrl.u32 %v984, 7
        %v986 = vsub.s32 %v983, %v985
        %v987 = vrot.slane %v973, %v986
        %v988 = vcombine.high %v980, %v980
        %v989 = vcombine.high %v987, %v987
        %v990 = vunpack.i.l.s16 %v980
        %v991 = vunpack.i.h.s16 %v980
        %v992 = vunpack.i.l.s16 %v987
        %v993 = vunpack.i.h.s16 %v987
        %v994 = vunpack.i.l.s16 %v988
        %v995 = vunpack.i.h.s16 %v988
        %v996 = vunpack.i.l.s16 %v989
        %v997 = vunpack.i.h.s16 %v989
        %v998 = vpack.i.b16 %v990, %v990
        %v999 = vpack.i.b16 %v991, %v991
        %v1000 = vpack.i.b16 %v992, %v992
        %v1001 = vpack.i.b16 %v993, %v993
        %v1002 = vpack.i.b16 %v994, %v994
        %v1003 = vpack.i.b16 %v995, %v995
        %v1004 = vpack.i.b16 %v996, %v996
        %v1005 = vpack.i.b16 %v997, %v997
        %v1006 = vlaneseq
        %v1007 = vshrl.u32 %v1006, 7
        %v1008 = vsub.s32 0, %v1007
        %v1009 = vrot.slane %v998, %v1008
        %v1010 = vlaneseq
        %v1011 = vshrl.u32 %v1010, 7
        %v1012 = vsub.s32 1, %v1011
        %v1013 = vrot.slane %v998, %v1012
        %v1014 = vlaneseq
        %v1015 = vshrl.u32 %v1014, 7
        %v1016 = vsub.s32 0, %v1015
        %v1017 = vrot.slane %v999, %v1016
        %v1018 = vlaneseq
        %v1019 = vshrl.u32 %v1018, 7
        %v1020 = vsub.s32 1, %v1019
        %v1021 = vrot.slane %v999, %v1020
        %v1022 = vlaneseq
        %v1023 = vshrl.u32 %v1022, 7
        %v1024 = vsub.s32 0, %v1023
        %v1025 = vrot.slane %v1000, %v1024
        %v1026 = vlaneseq
        %v1027 = vshrl.u32 %v1026, 7
        %v1028 = vsub.s32 1, %v1027
        %v1029 = vrot.slane %v1000, %v1028
        %v1030 = vlaneseq
        %v1031 = vshrl.u32 %v1030, 7
        %v1032 = vsub.s32 0, %v1031
        %v1033 = vrot.slane %v1001, %v1032
        %v1034 = vlaneseq
        %v1035 = vshrl.u32 %v1034, 7
        %v1036 = vsub.s32 1, %v1035
        %v1037 = vrot.slane %v1001, %v1036
        %v1038 = vlaneseq
        %v1039 = vshrl.u32 %v1038, 7
        %v1040 = vsub.s32 0, %v1039
        %v1041 = vrot.slane %v1002, %v1040
        %v1042 = vlaneseq
        %v1043 = vshrl.u32 %v1042, 7
        %v1044 = vsub.s32 1, %v1043
        %v1045 = vrot.slane %v1002, %v1044
        %v1046 = vlaneseq
        %v1047 = vshrl.u32 %v1046, 7
        %v1048 = vsub.s32 0, %v1047
        %v1049 = vrot.slane %v1003, %v1048
        %v1050 = vlaneseq
        %v1051 = vshrl.u32 %v1050, 7
        %v1052 = vsub.s32 1, %v1051
        %v1053 = vrot.slane %v1003, %v1052
        %v1054 = vlaneseq
        %v1055 = vshrl.u32 %v1054, 7
        %v1056 = vsub.s32 0, %v1055
        %v1057 = vrot.slane %v1004, %v1056
        %v1058 = vlaneseq
        %v1059 = vshrl.u32 %v1058, 7
        %v1060 = vsub.s32 1, %v1059
        %v1061 = vrot.slane %v1004, %v1060
        %v1062 = vlaneseq
        %v1063 = vshrl.u32 %v1062, 7
        %v1064 = vsub.s32 0, %v1063
        %v1065 = vrot.slane %v1005, %v1064
        %v1066 = vlaneseq
        %v1067 = vshrl.u32 %v1066, 7
        %v1068 = vsub.s32 1, %v1067
        %v1069 = vrot.slane %v1005, %v1068
        %v1071 = vpack.i.b16 %v1009, %v1009
        %v1073 = vlaneseq
        %v1074 = vshrl.u32 %v1073, 7
        %v1075 = vsub.s32 0, %v1074
        %v1076 = vrot.slane %v1071, %v1075
        %v1078 = vpack.i.b16 %v1013, %v1013
        %v1080 = vlaneseq
        %v1081 = vshrl.u32 %v1080, 7
        %v1082 = vsub.s32 0, %v1081
        %v1083 = vrot.slane %v1078, %v1082
        %v1085 = vpack.i.b16 %v1017, %v1017
        %v1087 = vlaneseq
        %v1088 = vshrl.u32 %v1087, 7
        %v1089 = vsub.s32 0, %v1088
        %v1090 = vrot.slane %v1085, %v1089
        %v1092 = vpack.i.b16 %v1021, %v1021
        %v1094 = vlaneseq
        %v1095 = vshrl.u32 %v1094, 7
        %v1096 = vsub.s32 0, %v1095
        %v1097 = vrot.slane %v1092, %v1096
        %v1099 = vpack.i.b16 %v1025, %v1025
        %v1101 = vlaneseq
        %v1102 = vshrl.u32 %v1101, 7
        %v1103 = vsub.s32 0, %v1102
        %v1104 = vrot.slane %v1099, %v1103
        %v1106 = vpack.i.b16 %v1029, %v1029
        %v1108 = vlaneseq
        %v1109 = vshrl.u32 %v1108, 7
        %v1110 = vsub.s32 0, %v1109
        %v1111 = vrot.slane %v1106, %v1110
        %v1113 = vpack.i.b16 %v1033, %v1033
        %v1115 = vlaneseq
        %v1116 = vshrl.u32 %v1115, 7
        %v1117 = vsub.s32 0, %v1116
        %v1118 = vrot.slane %v1113, %v1117
        %v1120 = vpack.i.b16 %v1037, %v1037
        %v1122 = vlaneseq
        %v1123 = vshrl.u32 %v1122, 7
        %v1124 = vsub.s32 0, %v1123
        %v1125 = vrot.slane %v1120, %v1124
        %v1127 = vpack.i.b16 %v1041, %v1041
        %v1129 = vlaneseq
        %v1130 = vshrl.u32 %v1129, 7
        %v1131 = vsub.s32 0, %v1130
        %v1132 = vrot.slane %v1127, %v1131
        %v1134 = vpack.i.b16 %v1045, %v1045
        %v1136 = vlaneseq
        %v1137 = vshrl.u32 %v1136, 7
        %v1138 = vsub.s32 0, %v1137
        %v1139 = vrot.slane %v1134, %v1138
        %v1141 = vpack.i.b16 %v1049, %v1049
        %v1143 = vlaneseq
        %v1144 = vshrl.u32 %v1143, 7
        %v1145 = vsub.s32 0, %v1144
        %v1146 = vrot.slane %v1141, %v1145
        %v1148 = vpack.i.b16 %v1053, %v1053
        %v1150 = vlaneseq
        %v1151 = vshrl.u32 %v1150, 7
        %v1152 = vsub.s32 0, %v1151
        %v1153 = vrot.slane %v1148, %v1152
        %v1155 = vpack.i.b16 %v1057, %v1057
        %v1157 = vlaneseq
        %v1158 = vshrl.u32 %v1157, 7
        %v1159 = vsub.s32 0, %v1158
        %v1160 = vrot.slane %v1155, %v1159
        %v1162 = vpack.i.b16 %v1061, %v1061
        %v1164 = vlaneseq
        %v1165 = vshrl.u32 %v1164, 7
        %v1166 = vsub.s32 0, %v1165
        %v1167 = vrot.slane %v1162, %v1166
        %v1169 = vpack.i.b16 %v1065, %v1065
        %v1171 = vlaneseq
        %v1172 = vshrl.u32 %v1171, 7
        %v1173 = vsub.s32 0, %v1172
        %v1174 = vrot.slane %v1169, %v1173
        %v1176 = vpack.i.b16 %v1069, %v1069
        %v1178 = vlaneseq
        %v1179 = vshrl.u32 %v1178, 7
        %v1180 = vsub.s32 0, %v1179
        %v1181 = vrot.slane %v1176, %v1180
        %v1182 = vmul.bf16 %v799, %v1076
        %v1183 = vmul.bf16 %v800, %v1083
        %v1184 = vmul.bf16 %v801, %v1090
        %v1185 = vmul.bf16 %v802, %v1097
        %v1186 = vmul.bf16 %v803, %v1104
        %v1187 = vmul.bf16 %v804, %v1111
        %v1188 = vmul.bf16 %v805, %v1118
        %v1189 = vmul.bf16 %v806, %v1125
        %v1190 = vmul.bf16 %v807, %v1132
        %v1191 = vmul.bf16 %v808, %v1139
        %v1192 = vmul.bf16 %v809, %v1146
        %v1193 = vmul.bf16 %v810, %v1153
        %v1194 = vmul.bf16 %v811, %v1160
        %v1195 = vmul.bf16 %v812, %v1167
        %v1196 = vmul.bf16 %v813, %v1174
        %v1197 = vmul.bf16 %v814, %v1181
        %v1198 = vmul.bf16 %v943, %v1076
        %v1199 = vmul.bf16 %v944, %v1083
        %v1200 = vmul.bf16 %v945, %v1090
        %v1201 = vmul.bf16 %v946, %v1097
        %v1202 = vmul.bf16 %v947, %v1104
        %v1203 = vmul.bf16 %v948, %v1111
        %v1204 = vmul.bf16 %v949, %v1118
        %v1205 = vmul.bf16 %v950, %v1125
        %v1206 = vmul.bf16 %v951, %v1132
        %v1207 = vmul.bf16 %v952, %v1139
        %v1208 = vmul.bf16 %v953, %v1146
        %v1209 = vmul.bf16 %v954, %v1153
        %v1210 = vmul.bf16 %v955, %v1160
        %v1211 = vmul.bf16 %v956, %v1167
        %v1212 = vmul.bf16 %v957, %v1174
        %v1213 = vmul.bf16 %v958, %v1181
        %v1214 = vld [vmem:[#allocation2] sm:$0xff]
        %v1215 = vld [vmem:[#allocation2 + $0x8] sm:$0xff]
        %v1216 = vld [vmem:[#allocation2 + $0x10] sm:$0xff]
        %v1217 = vld [vmem:[#allocation2 + $0x18] sm:$0xff]
        %v1218 = vld [vmem:[%s431] sm:$0xf]
        %v1219 = vld [vmem:[%s431 + $0x4] sm:$0xf]
        %v1220 = vld [vmem:[%s440] sm:$0xf]
        %v1221 = vld [vmem:[%s440 + $0x4] sm:$0xf]
        %v1224 = vunpack.c.l.b16 %v1220
        %v1225 = vunpack.c.l.b16 %v1221
        %v1226 = vpack.c.b16 %v1225, %v1224
        %1228 = vmatprep.subr.bf16.mxu0 %v1199
        %1229 = vmatpush1.bf16.msra.mxu0 %v1198
        %1230 = vmatprep.subr.bf16.mxu0 %v1201
        %1231 = vmatpush1.bf16.msra.mxu0 %v1200
        %1232 = vmatprep.subr.bf16.mxu0 %v1203
        %1233 = vmatpush1.bf16.msra.mxu0 %v1202
        %1234 = vmatprep.subr.bf16.mxu0 %v1205
        %1235 = vmatpush1.bf16.msra.mxu0 %v1204
        %1236 = vmatprep.subr.bf16.mxu0 %v1207
        %1237 = vmatpush1.bf16.msra.mxu0 %v1206
        %1238 = vmatprep.subr.bf16.mxu0 %v1209
        %1239 = vmatpush1.bf16.msra.mxu0 %v1208
        %1240 = vmatprep.subr.bf16.mxu0 %v1211
        %1241 = vmatpush1.bf16.msra.mxu0 %v1210
        %1242 = vmatprep.subr.bf16.mxu0 %v1213
        %1243 = vmatpush1.bf16.msra.mxu0 %v1212
        %1244 = vmatprep.subr.bf16.mxu0 0
        %1245 = vmatpush1.bf16.msra.mxu0 0
        %1246 = vmatprep.subr.bf16.mxu0 0
        %1247 = vmatpush1.bf16.msra.mxu0 0
        %1248 = vmatprep.subr.bf16.mxu0 0
        %1249 = vmatpush1.bf16.msra.mxu0 0
        %1250 = vmatprep.subr.bf16.mxu0 0
        %1251 = vmatpush1.bf16.msra.mxu0 0
        %1252 = vmatprep.subr.bf16.mxu0 0
        %1253 = vmatpush1.bf16.msra.mxu0 0
        %1254 = vmatprep.subr.bf16.mxu0 0
        %1255 = vmatpush1.bf16.msra.mxu0 0
        %1256 = vmatprep.subr.bf16.mxu0 0
        %1257 = vmatpush1.bf16.msra.mxu0 0
        %1258 = vmatprep.subr.bf16.mxu0 0
        %1259 = vmatpush1.bf16.msra.mxu0 0
        %1260 = vmatprep.mubr.bf16.mxu0 0
        %1261 = vmatmul.mubr.bf16.gmra.mrb[0].mxu0 %v1226
        %v1262 = vpop.f32.mrb[0].mxu0
        %v1263 = vadd.f32 0.0, %v1262
        %v1264 = vpop.f32.mrb[0].mxu0
        %v1265 = vadd.f32 0.0, %v1264
        %v1266 = vpop.f32.mrb[0].mxu0
        %v1267 = vadd.f32 0.0, %v1266
        %v1268 = vpop.f32.mrb[0].mxu0
        %v1269 = vadd.f32 0.0, %v1268
        %1270 = vdwg.mxu0
        %v1273 = vunpack.c.l.b16 %v1218
        %v1274 = vunpack.c.l.b16 %v1219
        %v1275 = vpack.c.b16 %v1274, %v1273
        %1277 = vmatprep.subr.bf16.mxu0 %v1183
        %1278 = vmatpush1.bf16.msra.mxu0 %v1182
        %1279 = vmatprep.subr.bf16.mxu0 %v1185
        %1280 = vmatpush1.bf16.msra.mxu0 %v1184
        %1281 = vmatprep.subr.bf16.mxu0 %v1187
        %1282 = vmatpush1.bf16.msra.mxu0 %v1186
        %1283 = vmatprep.subr.bf16.mxu0 %v1189
        %1284 = vmatpush1.bf16.msra.mxu0 %v1188
        %1285 = vmatprep.subr.bf16.mxu0 %v1191
        %1286 = vmatpush1.bf16.msra.mxu0 %v1190
        %1287 = vmatprep.subr.bf16.mxu0 %v1193
        %1288 = vmatpush1.bf16.msra.mxu0 %v1192
        %1289 = vmatprep.subr.bf16.mxu0 %v1195
        %1290 = vmatpush1.bf16.msra.mxu0 %v1194
        %1291 = vmatprep.subr.bf16.mxu0 %v1197
        %1292 = vmatpush1.bf16.msra.mxu0 %v1196
        %1293 = vmatprep.subr.bf16.mxu0 0
        %1294 = vmatpush1.bf16.msra.mxu0 0
        %1295 = vmatprep.subr.bf16.mxu0 0
        %1296 = vmatpush1.bf16.msra.mxu0 0
        %1297 = vmatprep.subr.bf16.mxu0 0
        %1298 = vmatpush1.bf16.msra.mxu0 0
        %1299 = vmatprep.subr.bf16.mxu0 0
        %1300 = vmatpush1.bf16.msra.mxu0 0
        %1301 = vmatprep.subr.bf16.mxu0 0
        %1302 = vmatpush1.bf16.msra.mxu0 0
        %1303 = vmatprep.subr.bf16.mxu0 0
        %1304 = vmatpush1.bf16.msra.mxu0 0
        %1305 = vmatprep.subr.bf16.mxu0 0
        %1306 = vmatpush1.bf16.msra.mxu0 0
        %1307 = vmatprep.subr.bf16.mxu0 0
        %1308 = vmatpush1.bf16.msra.mxu0 0
        %1309 = vmatprep.mubr.bf16.mxu0 0
        %1310 = vmatmul.mubr.bf16.gmra.mrb[0].mxu0 %v1275
        %v1311 = vpop.f32.mrb[0].mxu0
        %v1312 = vadd.f32 %v1263, %v1311
        %v1313 = vpop.f32.mrb[0].mxu0
        %v1314 = vadd.f32 %v1265, %v1313
        %v1315 = vpop.f32.mrb[0].mxu0
        %v1316 = vadd.f32 %v1267, %v1315
        %v1317 = vpop.f32.mrb[0].mxu0
        %v1318 = vadd.f32 %v1269, %v1317
        %1319 = vdwg.mxu0
        %v1320 = vadd.f32 %v1214, %v1312
        %v1321 = vadd.f32 %v1215, %v1314
        %v1322 = vadd.f32 %v1216, %v1316
        %v1323 = vadd.f32 %v1217, %v1318
        %1324 = vst [vmem:[#allocation2] sm:$0xff] %v1320
        %1325 = vst [vmem:[#allocation2 + $0x8] sm:$0xff] %v1321
        %1326 = vst [vmem:[#allocation2 + $0x10] sm:$0xff] %v1322
        %1327 = vst [vmem:[#allocation2 + $0x18] sm:$0xff] %v1323
        %p1328 = scmp.eq.s32.totalorder %s40, 2
        // Predicated region
        $region77: #{tpu_custom_call.1} parent=47 // pred_check
          %p1329 = pneg %p1328
        $region78: #{tpu_custom_call.1} parent=47 // pred_check_branch
          %1331 = sbr.rel (%p1329) target = $region80
        $region79: #{tpu_custom_call.1} parent=47 // pred_region
          %v1332 = vld [vmem:[#allocation2] sm:$0xff]
          %v1333 = vld [vmem:[#allocation2 + $0x8] sm:$0xff]
          %v1334 = vld [vmem:[#allocation2 + $0x10] sm:$0xff]
          %v1335 = vld [vmem:[#allocation2 + $0x18] sm:$0xff]
          %1336 = vst [vmem:[%s525] sm:$0xff] %v1332
          %1337 = vst [vmem:[%s525 + $0x8] sm:$0xff] %v1333
          %1338 = vst [vmem:[%s525 + $0x10] sm:$0xff] %v1334
          %1339 = vst [vmem:[%s525 + $0x18] sm:$0xff] %v1335
        $region80: #{tpu_custom_call.1} parent=47 // pred_fallthru
          _
        %s1340 = sand.u32 %s252, 1
        %s1341 = scalar_lea.sflag [#allocation5], %s1340
        %s1342 = sand.u32 %s252, 1
        %s1343 = smul.addr %s1342, 32
        %s1344 = scalar_lea.vmem [#allocation14], %s1343
        // Predicated region
        $region81: #{tpu_custom_call.1} parent=47 // pred_check
          %p1345 = pneg %p262
        $region82: #{tpu_custom_call.1} parent=47 // pred_check_branch
          %1347 = sbr.rel (%p1345) target = $region84
        $region83: #{tpu_custom_call.1} parent=47 // pred_region
          %s1348 = smul.u32 2, %s38
          %s1349 = smul.u32 2, %s39
          %s1351 = ssub.s32 512, 512
          %1352 = vsyncadd %s1341, %s1351
          %s1353 = smul.addr %s1348, 4
          %s1354 = sadd.s32 %s1349, %s1353
          %s1355 = smul.addr %s1354, 128
          %s1356 = scalar_lea.hbm %s7, %s1355
          %s1357 = sshll.u32 %s1344, 4
          %s1358 = int_to_ptr.vmem [resolvable:$true] %s1357
          %1363 = dma.vmem_to_hbm [thread:$0]  %s1358, 512, %s1356, %s1341, 256, 512, 16
        $region84: #{tpu_custom_call.1} parent=47 // pred_fallthru
          _
      $region48: #{tpu_custom_call.1} parent=5 // pred_fallthru
        _
      %p1364 = scmp.le.s32.totalorder 2, %s28
      // Predicated region
      $region85: #{tpu_custom_call.1} parent=5 // pred_check
        %p1365 = pneg %p1364
      $region86: #{tpu_custom_call.1} parent=5 // pred_check_branch
        %1367 = sbr.rel (%p1365) target = $region88
      $region87: #{tpu_custom_call.1} parent=5 // pred_region
        %s1368 = ssub.s32 %s28, 2
        // Predicated region
        $region89: #{tpu_custom_call.1} parent=87 // pred_check
          %p1369 = pneg %p268
        $region90: #{tpu_custom_call.1} parent=87 // pred_check_branch
          %1371 = sbr.rel (%p1369) target = $region92
        $region91: #{tpu_custom_call.1} parent=87 // pred_region
          %s1372 = sand.u32 %s253, 1
          %s1373 = scalar_lea.sflag [#allocation5], %s1372
          %s1374 = sand.u32 %s253, 1
          %s1375 = smul.addr %s1374, 32
          %s1376 = scalar_lea.vmem [#allocation14], %s1375
          %1377 = dma.done %s1373, 512
        $region92: #{tpu_custom_call.1} parent=87 // pred_fallthru
          _
      $region88: #{tpu_custom_call.1} parent=5 // pred_fallthru
        _
    $region6: #{tpu_custom_call.1} parent=1 // loop_footer
      %s32 = sadd.s32 1, %s28
    $region7: #{tpu_custom_call.1} parent=1 // loop_footer_branch
      %27 = sbr.rel target = $region3
    $region8: #{tpu_custom_call.1} parent=1 // loop_exit
      _
    %1378 = vsyncpa [#allocation4], 1
    %s1379 = scalar_lea.sflag [#allocation4], 1
    %1380 = vsyncpa %s1379, 1
    %1381 = vsyncpa [#allocation7], 1
    %s1382 = scalar_lea.sflag [#allocation7], 1
    %1383 = vsyncpa %s1382, 1
    %1384 = vsyncpa [#allocation10], 1
    %s1385 = scalar_lea.sflag [#allocation10], 1
    %1386 = vsyncpa %s1385, 1
    %1387 = vsyncpa [#allocation13], 1
    %s1388 = scalar_lea.sflag [#allocation13], 1
    %1389 = vsyncpa %s1388, 1
    %1390 = vsyncpa [#allocation5], 1
    %s1391 = scalar_lea.sflag [#allocation5], 1
    %1392 = vsyncpa %s1391, 1

</llo_original>
